<compile_context>
chip_gen: v5e
topology: v5e:2x2
jax: 0.10.0
libtpu: 0.0.40
codegen_flags: <defaults>
</compile_context>

<pallas_src>
import functools

import jax
import jax.numpy as jnp
from jax.experimental import pallas as pl
from jax.experimental.pallas import tpu as pltpu


def _round_up(x, m):
    return ((x + m - 1) // m) * m


def _layer_dims(n_timestamps, n_encoding_layers, reduction):
    """Reproduce the mlp_in_list / layer sizing logic of AE.__init__.

    Returns a list of (in_features, out_features) for every Linear layer
    (encoder layers followed by decoder layers, final layer has no ReLU).
    """
    mlp_in = n_timestamps
    sizes = [mlp_in]
    enc = [(mlp_in, round(mlp_in * reduction))]
    for _ in range(1, n_encoding_layers):
        mlp_in = round(mlp_in * reduction)
        sizes.append(mlp_in)
        enc.append((mlp_in, round(mlp_in * reduction)))
    sizes.append(round(mlp_in * reduction))
    dec = []
    for n in range(0, n_encoding_layers - 1):
        dec.append((sizes[-n - 1], sizes[-n - 2]))
    dec.append((sizes[1], sizes[0]))
    return enc + dec


def _ae_kernel(n_layers, x_ref, *refs):
    """Fused MLP chain in transposed (lane-dense) form.

    x_ref:   (F_in, TB)           -- one batch tile, batch on lanes
    refs  = (w_0, b_0, ..., w_{n-1}, b_{n-1}, out_ref)
    w_i:     (out_i, in_i)        -- PyTorch Linear layout
    b_i:     (out_i, 1)           -- broadcasts over the lane (batch) axis
    out_ref: (F_out, TB)

    Every Linear except the last is followed by ReLU (matches encoder+decoder
    structure where only the final `linear_out` has no activation).
    """
    out_ref = refs[-1]
    h = x_ref[...]                                   # f32 (F_in, TB)
    for i in range(n_layers):
        w = refs[2 * i][...]                         # (out_i, in_i)
        b = refs[2 * i + 1][...]                     # (out_i, 1)
        h = jnp.dot(w, h, preferred_element_type=jnp.float32) + b
        if i < n_layers - 1:
            h = jnp.maximum(h, 0.0)                  # ReLU
    out_ref[...] = h.astype(out_ref.dtype)


def ae_forward(x, params, batch_tile=512):
    """x: (B, n_timestamps) f32.  params: list of (w, b), w:(out,in), b:(out,)."""
    B, F_in = x.shape
    n_layers = len(params)
    F_out = params[-1][0].shape[0]

    # Batch tile: multiple of 128 (lane-dense), capped so tiny batches don't
    # over-pad; padded batch columns are computed and then sliced off.
    TB = min(int(batch_tile), _round_up(max(B, 1), 128))
    TB = _round_up(TB, 128)
    B_pad = _round_up(B, TB)

    # Lane-dense transposed activations: (F_in, B_pad).
    xt = jnp.transpose(x)
    if B_pad != B:
        xt = jnp.pad(xt, ((0, 0), (0, B_pad - B)))

    flat_inputs = [xt]
    in_specs = [pl.BlockSpec((F_in, TB), lambda i: (0, i))]
    for (w, b) in params:
        flat_inputs.append(w)                                     # (out, in)
        in_specs.append(pl.BlockSpec(w.shape, lambda i: (0, 0)))  # VMEM-resident
        b2 = b.reshape(-1, 1)                                     # (out, 1)
        flat_inputs.append(b2)
        in_specs.append(pl.BlockSpec(b2.shape, lambda i: (0, 0)))

    kernel = functools.partial(_ae_kernel, n_layers)

    # Advisory cost hint for the surrounding XLA schedule.
    flops = 2 * B_pad * sum(int(w.shape[0]) * int(w.shape[1]) for (w, _) in params)
    bytes_accessed = 4 * (int(xt.size) + B_pad * F_out
                          + sum(int(w.size) + int(b.size) for (w, b) in params))

    out_t = pl.pallas_call(
        kernel,
        out_shape=jax.ShapeDtypeStruct((F_out, B_pad), x.dtype),
        grid_spec=pltpu.PrefetchScalarGridSpec(
            num_scalar_prefetch=0,
            grid=(B_pad // TB,),
            in_specs=in_specs,
            out_specs=pl.BlockSpec((F_out, TB), lambda i: (0, i)),
        ),
        compiler_params=pltpu.CompilerParams(
            dimension_semantics=("parallel",)),
        cost_estimate=pl.CostEstimate(
            flops=flops, transcendentals=0, bytes_accessed=bytes_accessed),
    )(*flat_inputs)

    # Back to the module's (B, F_out) layout, dropping batch padding.
    return jnp.transpose(out_t[:, :B])


def init_params(key, n_timestamps, n_encoding_layers, reduction):
    """Deterministic synthetic init for all Linear layers (encoder + decoder).

    Weights are stored PyTorch-style as (out_features, in_features).
    """
    all_dims = _layer_dims(n_timestamps, n_encoding_layers, reduction)
    params = []
    for (fin, fout) in all_dims:
        key, kw, kb = jax.random.split(key, 3)
        scale = 1.0 / jnp.sqrt(jnp.float32(fin))
        w = jax.random.uniform(kw, (fout, fin), jnp.float32, -scale, scale)
        b = jax.random.uniform(kb, (fout,), jnp.float32, -scale, scale)
        params.append((w, b))
    return params


def ae_reference(x, params):
    """Plain-JAX reference of the same forward pass (for sanity checking)."""
    h = x
    n = len(params)
    for i, (w, b) in enumerate(params):
        h = h @ w.T + b
        if i < n - 1:
            h = jnp.maximum(h, 0.0)
    return h


if __name__ == "__main__":
    # Small config consistent with the module: n_timestamps=64, 3 encoding layers,
    # reduction=0.5  ->  encoder 64->32->16->8, decoder 8->16->32->64.
    n_timestamps = 64
    n_encoding_layers = 3
    reduction = 0.5
    batch = 8

    key = jax.random.PRNGKey(0)
    key, kx = jax.random.split(key)
    x = jax.random.normal(kx, (batch, n_timestamps), dtype=jnp.float32)

    params = init_params(key, n_timestamps, n_encoding_layers, reduction)

    out = ae_forward(x, params)
    out = jax.block_until_ready(out)

    ref = ae_reference(x, params)
    assert out.shape == (batch, n_timestamps)
    assert jnp.allclose(out, ref, atol=1e-4, rtol=1e-4)

    print("KERNEL_OK")
</pallas_src>

<mosaic_0001>
module attributes {stable_mosaic.version = 11 : i64} {
  func.func @_ae_kernel(%arg0: i32, %arg1: memref<64x128xf32, #tpu.memory_space<vmem>>, %arg2: memref<32x64xf32, #tpu.memory_space<vmem>>, %arg3: memref<32x1xf32, #tpu.memory_space<vmem>>, %arg4: memref<16x32xf32, #tpu.memory_space<vmem>>, %arg5: memref<16x1xf32, #tpu.memory_space<vmem>>, %arg6: memref<8x16xf32, #tpu.memory_space<vmem>>, %arg7: memref<8x1xf32, #tpu.memory_space<vmem>>, %arg8: memref<16x8xf32, #tpu.memory_space<vmem>>, %arg9: memref<16x1xf32, #tpu.memory_space<vmem>>, %arg10: memref<32x16xf32, #tpu.memory_space<vmem>>, %arg11: memref<32x1xf32, #tpu.memory_space<vmem>>, %arg12: memref<64x32xf32, #tpu.memory_space<vmem>>, %arg13: memref<64x1xf32, #tpu.memory_space<vmem>>, %arg14: memref<64x128xf32, #tpu.memory_space<vmem>>) attributes {dimension_semantics = [#tpu.dimension_semantics<parallel>], iteration_bounds = array<i64: 1>, scalar_prefetch = 0 : i64, scratch_operands = 0 : i64, tpu.core_type = #tpu.core_type<tc>, window_params = [{transform_indices = @transform_0, window_bounds = array<i64: 64, 128>}, {pipeline_mode = #tpu.pipeline_mode<synchronous>, transform_indices = @transform_1, window_bounds = array<i64: 32, 64>}, {pipeline_mode = #tpu.pipeline_mode<synchronous>, transform_indices = @transform_2, window_bounds = array<i64: 32, 1>}, {pipeline_mode = #tpu.pipeline_mode<synchronous>, transform_indices = @transform_3, window_bounds = array<i64: 16, 32>}, {pipeline_mode = #tpu.pipeline_mode<synchronous>, transform_indices = @transform_4, window_bounds = array<i64: 16, 1>}, {pipeline_mode = #tpu.pipeline_mode<synchronous>, transform_indices = @transform_5, window_bounds = array<i64: 8, 16>}, {pipeline_mode = #tpu.pipeline_mode<synchronous>, transform_indices = @transform_6, window_bounds = array<i64: 8, 1>}, {pipeline_mode = #tpu.pipeline_mode<synchronous>, transform_indices = @transform_7, window_bounds = array<i64: 16, 8>}, {pipeline_mode = #tpu.pipeline_mode<synchronous>, transform_indices = @transform_8, window_bounds = array<i64: 16, 1>}, {pipeline_mode = #tpu.pipeline_mode<synchronous>, transform_indices = @transform_9, window_bounds = array<i64: 32, 16>}, {pipeline_mode = #tpu.pipeline_mode<synchronous>, transform_indices = @transform_10, window_bounds = array<i64: 32, 1>}, {pipeline_mode = #tpu.pipeline_mode<synchronous>, transform_indices = @transform_11, window_bounds = array<i64: 64, 32>}, {pipeline_mode = #tpu.pipeline_mode<synchronous>, transform_indices = @transform_12, window_bounds = array<i64: 64, 1>}, {transform_indices = @transform_13, window_bounds = array<i64: 64, 128>}]} {
    %c0 = arith.constant 0 : index
    %c0_0 = arith.constant 0 : index
    %0 = vector.load %arg1[%c0, %c0_0] : memref<64x128xf32, #tpu.memory_space<vmem>>, vector<64x128xf32>
    %c0_1 = arith.constant 0 : index
    %c0_2 = arith.constant 0 : index
    %1 = vector.load %arg2[%c0_1, %c0_2] : memref<32x64xf32, #tpu.memory_space<vmem>>, vector<32x64xf32>
    %c0_3 = arith.constant 0 : index
    %c0_4 = arith.constant 0 : index
    %2 = vector.load %arg3[%c0_3, %c0_4] : memref<32x1xf32, #tpu.memory_space<vmem>>, vector<32x1xf32>
    %cst = arith.constant dense<0.000000e+00> : vector<32x128xf32>
    %3 = tpu.matmul %1, %0, %cst {dimension_numbers = #tpu.dot_dimension_numbers<[1], [0], [0], [1], [0, 0, 1, 1], [], []>} : vector<32x64xf32>, vector<64x128xf32>, vector<32x128xf32> -> vector<32x128xf32>
    %4 = vector.broadcast %2 : vector<32x1xf32> to vector<32x128xf32>
    %5 = arith.addf %3, %4 : vector<32x128xf32>
    %cst_5 = arith.constant 0.000000e+00 : f32
    %6 = vector.broadcast %cst_5 : f32 to vector<32x128xf32>
    %7 = arith.maximumf %5, %6 : vector<32x128xf32>
    %c0_6 = arith.constant 0 : index
    %c0_7 = arith.constant 0 : index
    %8 = vector.load %arg4[%c0_6, %c0_7] : memref<16x32xf32, #tpu.memory_space<vmem>>, vector<16x32xf32>
    %c0_8 = arith.constant 0 : index
    %c0_9 = arith.constant 0 : index
    %9 = vector.load %arg5[%c0_8, %c0_9] : memref<16x1xf32, #tpu.memory_space<vmem>>, vector<16x1xf32>
    %cst_10 = arith.constant dense<0.000000e+00> : vector<16x128xf32>
    %10 = tpu.matmul %8, %7, %cst_10 {dimension_numbers = #tpu.dot_dimension_numbers<[1], [0], [0], [1], [0, 0, 1, 1], [], []>} : vector<16x32xf32>, vector<32x128xf32>, vector<16x128xf32> -> vector<16x128xf32>
    %11 = vector.broadcast %9 : vector<16x1xf32> to vector<16x128xf32>
    %12 = arith.addf %10, %11 : vector<16x128xf32>
    %cst_11 = arith.constant 0.000000e+00 : f32
    %13 = vector.broadcast %cst_11 : f32 to vector<16x128xf32>
    %14 = arith.maximumf %12, %13 : vector<16x128xf32>
    %c0_12 = arith.constant 0 : index
    %c0_13 = arith.constant 0 : index
    %15 = vector.load %arg6[%c0_12, %c0_13] : memref<8x16xf32, #tpu.memory_space<vmem>>, vector<8x16xf32>
    %c0_14 = arith.constant 0 : index
    %c0_15 = arith.constant 0 : index
    %16 = vector.load %arg7[%c0_14, %c0_15] : memref<8x1xf32, #tpu.memory_space<vmem>>, vector<8x1xf32>
    %cst_16 = arith.constant dense<0.000000e+00> : vector<8x128xf32>
    %17 = tpu.matmul %15, %14, %cst_16 {dimension_numbers = #tpu.dot_dimension_numbers<[1], [0], [0], [1], [0, 0, 1, 1], [], []>} : vector<8x16xf32>, vector<16x128xf32>, vector<8x128xf32> -> vector<8x128xf32>
    %18 = vector.broadcast %16 : vector<8x1xf32> to vector<8x128xf32>
    %19 = arith.addf %17, %18 : vector<8x128xf32>
    %cst_17 = arith.constant 0.000000e+00 : f32
    %20 = vector.broadcast %cst_17 : f32 to vector<8x128xf32>
    %21 = arith.maximumf %19, %20 : vector<8x128xf32>
    %c0_18 = arith.constant 0 : index
    %c0_19 = arith.constant 0 : index
    %22 = vector.load %arg8[%c0_18, %c0_19] : memref<16x8xf32, #tpu.memory_space<vmem>>, vector<16x8xf32>
    %c0_20 = arith.constant 0 : index
    %c0_21 = arith.constant 0 : index
    %23 = vector.load %arg9[%c0_20, %c0_21] : memref<16x1xf32, #tpu.memory_space<vmem>>, vector<16x1xf32>
    %cst_22 = arith.constant dense<0.000000e+00> : vector<16x128xf32>
    %24 = tpu.matmul %22, %21, %cst_22 {dimension_numbers = #tpu.dot_dimension_numbers<[1], [0], [0], [1], [0, 0, 1, 1], [], []>} : vector<16x8xf32>, vector<8x128xf32>, vector<16x128xf32> -> vector<16x128xf32>
    %25 = vector.broadcast %23 : vector<16x1xf32> to vector<16x128xf32>
    %26 = arith.addf %24, %25 : vector<16x128xf32>
    %cst_23 = arith.constant 0.000000e+00 : f32
    %27 = vector.broadcast %cst_23 : f32 to vector<16x128xf32>
    %28 = arith.maximumf %26, %27 : vector<16x128xf32>
    %c0_24 = arith.constant 0 : index
    %c0_25 = arith.constant 0 : index
    %29 = vector.load %arg10[%c0_24, %c0_25] : memref<32x16xf32, #tpu.memory_space<vmem>>, vector<32x16xf32>
    %c0_26 = arith.constant 0 : index
    %c0_27 = arith.constant 0 : index
    %30 = vector.load %arg11[%c0_26, %c0_27] : memref<32x1xf32, #tpu.memory_space<vmem>>, vector<32x1xf32>
    %cst_28 = arith.constant dense<0.000000e+00> : vector<32x128xf32>
    %31 = tpu.matmul %29, %28, %cst_28 {dimension_numbers = #tpu.dot_dimension_numbers<[1], [0], [0], [1], [0, 0, 1, 1], [], []>} : vector<32x16xf32>, vector<16x128xf32>, vector<32x128xf32> -> vector<32x128xf32>
    %32 = vector.broadcast %30 : vector<32x1xf32> to vector<32x128xf32>
    %33 = arith.addf %31, %32 : vector<32x128xf32>
    %cst_29 = arith.constant 0.000000e+00 : f32
    %34 = vector.broadcast %cst_29 : f32 to vector<32x128xf32>
    %35 = arith.maximumf %33, %34 : vector<32x128xf32>
    %c0_30 = arith.constant 0 : index
    %c0_31 = arith.constant 0 : index
    %36 = vector.load %arg12[%c0_30, %c0_31] : memref<64x32xf32, #tpu.memory_space<vmem>>, vector<64x32xf32>
    %c0_32 = arith.constant 0 : index
    %c0_33 = arith.constant 0 : index
    %37 = vector.load %arg13[%c0_32, %c0_33] : memref<64x1xf32, #tpu.memory_space<vmem>>, vector<64x1xf32>
    %cst_34 = arith.constant dense<0.000000e+00> : vector<64x128xf32>
    %38 = tpu.matmul %36, %35, %cst_34 {dimension_numbers = #tpu.dot_dimension_numbers<[1], [0], [0], [1], [0, 0, 1, 1], [], []>} : vector<64x32xf32>, vector<32x128xf32>, vector<64x128xf32> -> vector<64x128xf32>
    %39 = vector.broadcast %37 : vector<64x1xf32> to vector<64x128xf32>
    %40 = arith.addf %38, %39 : vector<64x128xf32>
    %c0_35 = arith.constant 0 : index
    %c0_36 = arith.constant 0 : index
    %41 = vector.load %arg14[%c0_35, %c0_36] : memref<64x128xf32, #tpu.memory_space<vmem>>, vector<64x128xf32>
    tpu.vector_store %arg14[%c0_35, %c0_36], %40 {strides = array<i32>} : memref<64x128xf32, #tpu.memory_space<vmem>>, vector<64x128xf32>,
    return
  }
  func.func @transform_0(%arg0: i32) -> (i32, i32) {
    %c0_i32 = arith.constant 0 : i32
    %c0_i32_0 = arith.constant 0 : i32
    return %c0_i32, %arg0 : i32, i32
  }
  func.func @transform_1(%arg0: i32) -> (i32, i32) {
    %c0_i32 = arith.constant 0 : i32
    %c0_i32_0 = arith.constant 0 : i32
    %c0_i32_1 = arith.constant 0 : i32
    return %c0_i32, %c0_i32_0 : i32, i32
  }
  func.func @transform_2(%arg0: i32) -> (i32, i32) {
    %c0_i32 = arith.constant 0 : i32
    %c0_i32_0 = arith.constant 0 : i32
    %c0_i32_1 = arith.constant 0 : i32
    return %c0_i32, %c0_i32_0 : i32, i32
  }
  func.func @transform_3(%arg0: i32) -> (i32, i32) {
    %c0_i32 = arith.constant 0 : i32
    %c0_i32_0 = arith.constant 0 : i32
    %c0_i32_1 = arith.constant 0 : i32
    return %c0_i32, %c0_i32_0 : i32, i32
  }
  func.func @transform_4(%arg0: i32) -> (i32, i32) {
    %c0_i32 = arith.constant 0 : i32
    %c0_i32_0 = arith.constant 0 : i32
    %c0_i32_1 = arith.constant 0 : i32
    return %c0_i32, %c0_i32_0 : i32, i32
  }
  func.func @transform_5(%arg0: i32) -> (i32, i32) {
    %c0_i32 = arith.constant 0 : i32
    %c0_i32_0 = arith.constant 0 : i32
    %c0_i32_1 = arith.constant 0 : i32
    return %c0_i32, %c0_i32_0 : i32, i32
  }
  func.func @transform_6(%arg0: i32) -> (i32, i32) {
    %c0_i32 = arith.constant 0 : i32
    %c0_i32_0 = arith.constant 0 : i32
    %c0_i32_1 = arith.constant 0 : i32
    return %c0_i32, %c0_i32_0 : i32, i32
  }
  func.func @transform_7(%arg0: i32) -> (i32, i32) {
    %c0_i32 = arith.constant 0 : i32
    %c0_i32_0 = arith.constant 0 : i32
    %c0_i32_1 = arith.constant 0 : i32
    return %c0_i32, %c0_i32_0 : i32, i32
  }
  func.func @transform_8(%arg0: i32) -> (i32, i32) {
    %c0_i32 = arith.constant 0 : i32
    %c0_i32_0 = arith.constant 0 : i32
    %c0_i32_1 = arith.constant 0 : i32
    return %c0_i32, %c0_i32_0 : i32, i32
  }
  func.func @transform_9(%arg0: i32) -> (i32, i32) {
    %c0_i32 = arith.constant 0 : i32
    %c0_i32_0 = arith.constant 0 : i32
    %c0_i32_1 = arith.constant 0 : i32
    return %c0_i32, %c0_i32_0 : i32, i32
  }
  func.func @transform_10(%arg0: i32) -> (i32, i32) {
    %c0_i32 = arith.constant 0 : i32
    %c0_i32_0 = arith.constant 0 : i32
    %c0_i32_1 = arith.constant 0 : i32
    return %c0_i32, %c0_i32_0 : i32, i32
  }
  func.func @transform_11(%arg0: i32) -> (i32, i32) {
    %c0_i32 = arith.constant 0 : i32
    %c0_i32_0 = arith.constant 0 : i32
    %c0_i32_1 = arith.constant 0 : i32
    return %c0_i32, %c0_i32_0 : i32, i32
  }
  func.func @transform_12(%arg0: i32) -> (i32, i32) {
    %c0_i32 = arith.constant 0 : i32
    %c0_i32_0 = arith.constant 0 : i32
    %c0_i32_1 = arith.constant 0 : i32
    return %c0_i32, %c0_i32_0 : i32, i32
  }
  func.func @transform_13(%arg0: i32) -> (i32, i32) {
    %c0_i32 = arith.constant 0 : i32
    %c0_i32_0 = arith.constant 0 : i32
    return %c0_i32, %arg0 : i32, i32
  }
}

</mosaic_0001>

<llo_original>
// kernel: tpu_custom_call.1
$region0: #{tpu_custom_call.1}
  #allocation0 [shape = 'u32[]', space=smem, size = 0x4, offset = 0x4, fixed_abs, tag = 'smem constant byte address 0x4 - core index']
  #allocation1 [shape = 'u32[72,128]{1,0:T(1,128)}', space=vmem, size = 0x9000, scoped, tag = 'internal scratch']
  %s0 = inlined_call_operand.vmem [shape: f32[64,128], index: 0, kind: input, shape index: {}]
  %s1 = inlined_call_operand.vmem [shape: f32[32,64], index: 1, kind: input, shape index: {}]
  %s2 = inlined_call_operand.vmem [shape: f32[32,1], index: 2, kind: input, shape index: {}]
  %s3 = inlined_call_operand.vmem [shape: f32[16,32], index: 3, kind: input, shape index: {}]
  %s4 = inlined_call_operand.vmem [shape: f32[16,1], index: 4, kind: input, shape index: {}]
  %s5 = inlined_call_operand.vmem [shape: f32[8,16], index: 5, kind: input, shape index: {}]
  %s6 = inlined_call_operand.vmem [shape: f32[8,1], index: 6, kind: input, shape index: {}]
  %s7 = inlined_call_operand.vmem [shape: f32[16,8], index: 7, kind: input, shape index: {}]
  %s8 = inlined_call_operand.vmem [shape: f32[16,1], index: 8, kind: input, shape index: {}]
  %s9 = inlined_call_operand.vmem [shape: f32[32,16], index: 9, kind: input, shape index: {}]
  %s10 = inlined_call_operand.vmem [shape: f32[32,1], index: 10, kind: input, shape index: {}]
  %s11 = inlined_call_operand.vmem [shape: f32[64,32], index: 11, kind: input, shape index: {}]
  %s12 = inlined_call_operand.vmem [shape: f32[64,1], index: 12, kind: input, shape index: {}]
  %s13 = inlined_call_operand.hbm [shape: f32[64,128], index: 13, kind: output, shape index: {}]
  %s14 = sld [smem:[#allocation0]]
  $region62: #{tpu_custom_call.1} parent=0
    _
  %s16 = ssub.s32 1, %s14
  %s17 = scalar_select 0, %s16, %s14
  $region1: #{tpu_custom_call.1} parent=0
    #allocation2 [shape = 'u8[32768]{0}', space=vmem, size = 0x8000, scoped, tag = 'output window, operand 0, single buffered']
    #allocation3 [shape = 's32[1]{0}', space=sflag, size = 0x4, scoped, tag = 'scoped memory for tpu_custom_call.1']
    %18 = vsyncpa [#allocation3], 0
    // Predicated region
    $region2: #{tpu_custom_call.1} parent=1 // pred_check
      _
    $region3: #{tpu_custom_call.1} parent=1 // pred_check_branch
      %20 = sbr.rel (0) target = $region5
    $region4: #{tpu_custom_call.1} parent=1 // pred_region
      _
    $region5: #{tpu_custom_call.1} parent=1 // pred_fallthru
      _
    // Predicated region
    $region6: #{tpu_custom_call.1} parent=1 // pred_check
      _
    $region7: #{tpu_custom_call.1} parent=1 // pred_check_branch
      %22 = sbr.rel (0) target = $region9
    $region8: #{tpu_custom_call.1} parent=1 // pred_region
      _
    $region9: #{tpu_custom_call.1} parent=1 // pred_fallthru
      _
    // Predicated region
    $region10: #{tpu_custom_call.1} parent=1 // pred_check
      _
    $region11: #{tpu_custom_call.1} parent=1 // pred_check_branch
      %24 = sbr.rel (0) target = $region13
    $region12: #{tpu_custom_call.1} parent=1 // pred_region
      _
    $region13: #{tpu_custom_call.1} parent=1 // pred_fallthru
      _
    // Predicated region
    $region14: #{tpu_custom_call.1} parent=1 // pred_check
      _
    $region15: #{tpu_custom_call.1} parent=1 // pred_check_branch
      %26 = sbr.rel (0) target = $region17
    $region16: #{tpu_custom_call.1} parent=1 // pred_region
      _
    $region17: #{tpu_custom_call.1} parent=1 // pred_fallthru
      _
    // Predicated region
    $region18: #{tpu_custom_call.1} parent=1 // pred_check
      _
    $region19: #{tpu_custom_call.1} parent=1 // pred_check_branch
      %28 = sbr.rel (0) target = $region21
    $region20: #{tpu_custom_call.1} parent=1 // pred_region
      _
    $region21: #{tpu_custom_call.1} parent=1 // pred_fallthru
      _
    // Predicated region
    $region22: #{tpu_custom_call.1} parent=1 // pred_check
      _
    $region23: #{tpu_custom_call.1} parent=1 // pred_check_branch
      %30 = sbr.rel (0) target = $region25
    $region24: #{tpu_custom_call.1} parent=1 // pred_region
      _
    $region25: #{tpu_custom_call.1} parent=1 // pred_fallthru
      _
    // Predicated region
    $region26: #{tpu_custom_call.1} parent=1 // pred_check
      _
    $region27: #{tpu_custom_call.1} parent=1 // pred_check_branch
      %32 = sbr.rel (0) target = $region29
    $region28: #{tpu_custom_call.1} parent=1 // pred_region
      _
    $region29: #{tpu_custom_call.1} parent=1 // pred_fallthru
      _
    // Predicated region
    $region30: #{tpu_custom_call.1} parent=1 // pred_check
      _
    $region31: #{tpu_custom_call.1} parent=1 // pred_check_branch
      %34 = sbr.rel (0) target = $region33
    $region32: #{tpu_custom_call.1} parent=1 // pred_region
      _
    $region33: #{tpu_custom_call.1} parent=1 // pred_fallthru
      _
    // Predicated region
    $region34: #{tpu_custom_call.1} parent=1 // pred_check
      _
    $region35: #{tpu_custom_call.1} parent=1 // pred_check_branch
      %36 = sbr.rel (0) target = $region37
    $region36: #{tpu_custom_call.1} parent=1 // pred_region
      _
    $region37: #{tpu_custom_call.1} parent=1 // pred_fallthru
      _
    // Predicated region
    $region38: #{tpu_custom_call.1} parent=1 // pred_check
      _
    $region39: #{tpu_custom_call.1} parent=1 // pred_check_branch
      %38 = sbr.rel (0) target = $region41
    $region40: #{tpu_custom_call.1} parent=1 // pred_region
      _
    $region41: #{tpu_custom_call.1} parent=1 // pred_fallthru
      _
    // Predicated region
    $region42: #{tpu_custom_call.1} parent=1 // pred_check
      _
    $region43: #{tpu_custom_call.1} parent=1 // pred_check_branch
      %40 = sbr.rel (0) target = $region45
    $region44: #{tpu_custom_call.1} parent=1 // pred_region
      _
    $region45: #{tpu_custom_call.1} parent=1 // pred_fallthru
      _
    // Predicated region
    $region46: #{tpu_custom_call.1} parent=1 // pred_check
      _
    $region47: #{tpu_custom_call.1} parent=1 // pred_check_branch
      %42 = sbr.rel (0) target = $region49
    $region48: #{tpu_custom_call.1} parent=1 // pred_region
      _
    $region49: #{tpu_custom_call.1} parent=1 // pred_fallthru
      _
    // Predicated region
    $region50: #{tpu_custom_call.1} parent=1 // pred_check
      _
    $region51: #{tpu_custom_call.1} parent=1 // pred_check_branch
      %44 = sbr.rel (0) target = $region53
    $region52: #{tpu_custom_call.1} parent=1 // pred_region
      _
    $region53: #{tpu_custom_call.1} parent=1 // pred_fallthru
      _
    %v45 = vld [vmem:[%s0] sm:$0xff]
    %v46 = vld [vmem:[%s0 + $0x8] sm:$0xff]
    %v47 = vld [vmem:[%s0 + $0x10] sm:$0xff]
    %v48 = vld [vmem:[%s0 + $0x18] sm:$0xff]
    %v49 = vld [vmem:[%s0 + $0x20] sm:$0xff]
    %v50 = vld [vmem:[%s0 + $0x28] sm:$0xff]
    %v51 = vld [vmem:[%s0 + $0x30] sm:$0xff]
    %v52 = vld [vmem:[%s0 + $0x38] sm:$0xff]
    %v53 = vld [vmem:[%s1] sm:$0xff]
    %v54 = vld [vmem:[%s1 + $0x8] sm:$0xff]
    %v55 = vld [vmem:[%s1 + $0x10] sm:$0xff]
    %v56 = vld [vmem:[%s1 + $0x18] sm:$0xff]
    %v57 = vld [vmem:[%s2] sm:$0xff]
    %v58 = vld [vmem:[%s2 + $0x8] sm:$0xff]
    %v59 = vld [vmem:[%s2 + $0x10] sm:$0xff]
    %v60 = vld [vmem:[%s2 + $0x18] sm:$0xff]
    %62 = vset.pattern.permute.xlu0 0
    %63 = vperm.xlu0 %62, %v57
    %v64 = vpop.permute.xlu0 %63
    %67 = vset.pattern.permute.xlu0 0
    %68 = vperm.xlu0 %67, %v58
    %v69 = vpop.permute.xlu0 %68
    %72 = vset.pattern.permute.xlu0 0
    %73 = vperm.xlu0 %72, %v59
    %v74 = vpop.permute.xlu0 %73
    %77 = vset.pattern.permute.xlu0 0
    %78 = vperm.xlu0 %77, %v60
    %v79 = vpop.permute.xlu0 %78
    %vm81 = vcmask 523264
    %v83 = vsel %vm81, %v53, 0
    %v86 = vsel %vm81, %v54, 0
    %v89 = vsel %vm81, %v55, 0
    %v92 = vsel %vm81, %v56, 0
    %94 = vmatpush.msra.mxu0 0.0
    %95 = vmatpush.msra.mxu0 0.0
    %96 = vmatpush.msra.mxu0 0.0
    %97 = vmatpush.msra.mxu0 0.0
    %98 = vmatpush.msra.mxu0 0.0
    %99 = vmatpush.msra.mxu0 0.0
    %100 = vmatpush.msra.mxu0 0.0
    %101 = vmatpush.msra.mxu0 0.0
    %102 = vmatpush.msra.mxu0 %v52
    %103 = vmatpush.msra.mxu0 %v51
    %104 = vmatpush.msra.mxu0 %v50
    %105 = vmatpush.msra.mxu0 %v49
    %106 = vmatpush.msra.mxu0 %v48
    %107 = vmatpush.msra.mxu0 %v47
    %108 = vmatpush.msra.mxu0 %v46
    %109 = vmatpush.msra.mxu0 %v45
    %110 = vmatmul.f32.gmra.mxu0 %v83
    %v111 = vpop.f32.mrf.mxu0
    %v112 = vadd.f32 %v64, %v111
    %113 = vmatmul.f32.gmra.mxu0 %v86
    %v114 = vpop.f32.mrf.mxu0
    %v115 = vadd.f32 %v69, %v114
    %116 = vmatmul.f32.gmra.mxu0 %v89
    %v117 = vpop.f32.mrf.mxu0
    %v118 = vadd.f32 %v74, %v117
    %119 = vmatmul.f32.gmra.mxu0 %v92
    %v120 = vpop.f32.mrf.mxu0
    %v121 = vadd.f32 %v79, %v120
    %122 = vdwg.mxu0
    %v123 = vmax.f32 %v112, 0.0
    %v124 = vmax.f32 %v115, 0.0
    %v125 = vmax.f32 %v118, 0.0
    %v126 = vmax.f32 %v121, 0.0
    %v127 = vld [vmem:[%s3] sm:$0xff]
    %v128 = vld [vmem:[%s3 + $0x8] sm:$0xff]
    %v129 = vld [vmem:[%s4] sm:$0xff]
    %v130 = vld [vmem:[%s4 + $0x8] sm:$0xff]
    %132 = vset.pattern.permute.xlu0 0
    %133 = vperm.xlu0 %132, %v129
    %v134 = vpop.permute.xlu0 %133
    %137 = vset.pattern.permute.xlu0 0
    %138 = vperm.xlu0 %137, %v130
    %v139 = vpop.permute.xlu0 %138
    %vm141 = vcmask 261120
    %v143 = vsel %vm141, %v127, 0
    %v146 = vsel %vm141, %v128, 0
    %148 = vmatpush.msra.mxu0 0.0
    %149 = vmatpush.msra.mxu0 0.0
    %150 = vmatpush.msra.mxu0 0.0
    %151 = vmatpush.msra.mxu0 0.0
    %152 = vmatpush.msra.mxu0 0.0
    %153 = vmatpush.msra.mxu0 0.0
    %154 = vmatpush.msra.mxu0 0.0
    %155 = vmatpush.msra.mxu0 0.0
    %156 = vmatpush.msra.mxu0 0.0
    %157 = vmatpush.msra.mxu0 0.0
    %158 = vmatpush.msra.mxu0 0.0
    %159 = vmatpush.msra.mxu0 0.0
    %160 = vmatpush.msra.mxu0 %v126
    %161 = vmatpush.msra.mxu0 %v125
    %162 = vmatpush.msra.mxu0 %v124
    %163 = vmatpush.msra.mxu0 %v123
    %164 = vmatmul.f32.gmra.mxu0 %v143
    %v165 = vpop.f32.mrf.mxu0
    %v166 = vadd.f32 %v134, %v165
    %167 = vmatmul.f32.gmra.mxu0 %v146
    %v168 = vpop.f32.mrf.mxu0
    %v169 = vadd.f32 %v139, %v168
    %170 = vdwg.mxu0
    %v171 = vmax.f32 %v166, 0.0
    %v172 = vmax.f32 %v169, 0.0
    %v173 = vld [vmem:[%s5] sm:$0xff]
    %v174 = vld [vmem:[%s6] sm:$0xff]
    %176 = vset.pattern.permute.xlu0 0
    %177 = vperm.xlu0 %176, %v174
    %v178 = vpop.permute.xlu0 %177
    %vm180 = vcmask 130048
    %v182 = vsel %vm180, %v173, 0
    %184 = vmatpush.msra.mxu0 0.0
    %185 = vmatpush.msra.mxu0 0.0
    %186 = vmatpush.msra.mxu0 0.0
    %187 = vmatpush.msra.mxu0 0.0
    %188 = vmatpush.msra.mxu0 0.0
    %189 = vmatpush.msra.mxu0 0.0
    %190 = vmatpush.msra.mxu0 0.0
    %191 = vmatpush.msra.mxu0 0.0
    %192 = vmatpush.msra.mxu0 0.0
    %193 = vmatpush.msra.mxu0 0.0
    %194 = vmatpush.msra.mxu0 0.0
    %195 = vmatpush.msra.mxu0 0.0
    %196 = vmatpush.msra.mxu0 0.0
    %197 = vmatpush.msra.mxu0 0.0
    %198 = vmatpush.msra.mxu0 %v172
    %199 = vmatpush.msra.mxu0 %v171
    %200 = vmatmul.f32.gmra.mxu0 %v182
    %v201 = vpop.f32.mrf.mxu0
    %v202 = vadd.f32 %v178, %v201
    %203 = vdwg.mxu0
    %v204 = vmax.f32 %v202, 0.0
    %v205 = vld [vmem:[%s7] sm:$0xff]
    %v206 = vld [vmem:[%s7 + $0x8] sm:$0xff]
    %v207 = vld [vmem:[%s8] sm:$0xff]
    %v208 = vld [vmem:[%s8 + $0x8] sm:$0xff]
    %210 = vset.pattern.permute.xlu0 0
    %211 = vperm.xlu0 %210, %v207
    %v212 = vpop.permute.xlu0 %211
    %215 = vset.pattern.permute.xlu0 0
    %216 = vperm.xlu0 %215, %v208
    %v217 = vpop.permute.xlu0 %216
    %vm219 = vcmask 64512
    %v221 = vsel %vm219, %v205, 0
    %v224 = vsel %vm219, %v206, 0
    %226 = vmatpush.msra.mxu0 0.0
    %227 = vmatpush.msra.mxu0 0.0
    %228 = vmatpush.msra.mxu0 0.0
    %229 = vmatpush.msra.mxu0 0.0
    %230 = vmatpush.msra.mxu0 0.0
    %231 = vmatpush.msra.mxu0 0.0
    %232 = vmatpush.msra.mxu0 0.0
    %233 = vmatpush.msra.mxu0 0.0
    %234 = vmatpush.msra.mxu0 0.0
    %235 = vmatpush.msra.mxu0 0.0
    %236 = vmatpush.msra.mxu0 0.0
    %237 = vmatpush.msra.mxu0 0.0
    %238 = vmatpush.msra.mxu0 0.0
    %239 = vmatpush.msra.mxu0 0.0
    %240 = vmatpush.msra.mxu0 0.0
    %241 = vmatpush.msra.mxu0 %v204
    %242 = vmatmul.f32.gmra.mxu0 %v221
    %v243 = vpop.f32.mrf.mxu0
    %v244 = vadd.f32 %v212, %v243
    %245 = vmatmul.f32.gmra.mxu0 %v224
    %v246 = vpop.f32.mrf.mxu0
    %v247 = vadd.f32 %v217, %v246
    %248 = vdwg.mxu0
    %v249 = vmax.f32 %v244, 0.0
    %v250 = vmax.f32 %v247, 0.0
    %v251 = vld [vmem:[%s9] sm:$0xff]
    %v252 = vld [vmem:[%s9 + $0x8] sm:$0xff]
    %v253 = vld [vmem:[%s9 + $0x10] sm:$0xff]
    %v254 = vld [vmem:[%s9 + $0x18] sm:$0xff]
    %v255 = vld [vmem:[%s10] sm:$0xff]
    %v256 = vld [vmem:[%s10 + $0x8] sm:$0xff]
    %v257 = vld [vmem:[%s10 + $0x10] sm:$0xff]
    %v258 = vld [vmem:[%s10 + $0x18] sm:$0xff]
    %260 = vset.pattern.permute.xlu0 0
    %261 = vperm.xlu0 %260, %v255
    %v262 = vpop.permute.xlu0 %261
    %265 = vset.pattern.permute.xlu0 0
    %266 = vperm.xlu0 %265, %v256
    %v267 = vpop.permute.xlu0 %266
    %270 = vset.pattern.permute.xlu0 0
    %271 = vperm.xlu0 %270, %v257
    %v272 = vpop.permute.xlu0 %271
    %275 = vset.pattern.permute.xlu0 0
    %276 = vperm.xlu0 %275, %v258
    %v277 = vpop.permute.xlu0 %276
    %v280 = vsel %vm180, %v251, 0
    %v283 = vsel %vm180, %v252, 0
    %v286 = vsel %vm180, %v253, 0
    %v289 = vsel %vm180, %v254, 0
    %291 = vmatpush.msra.mxu0 0.0
    %292 = vmatpush.msra.mxu0 0.0
    %293 = vmatpush.msra.mxu0 0.0
    %294 = vmatpush.msra.mxu0 0.0
    %295 = vmatpush.msra.mxu0 0.0
    %296 = vmatpush.msra.mxu0 0.0
    %297 = vmatpush.msra.mxu0 0.0
    %298 = vmatpush.msra.mxu0 0.0
    %299 = vmatpush.msra.mxu0 0.0
    %300 = vmatpush.msra.mxu0 0.0
    %301 = vmatpush.msra.mxu0 0.0
    %302 = vmatpush.msra.mxu0 0.0
    %303 = vmatpush.msra.mxu0 0.0
    %304 = vmatpush.msra.mxu0 0.0
    %305 = vmatpush.msra.mxu0 %v250
    %306 = vmatpush.msra.mxu0 %v249
    %307 = vmatmul.f32.gmra.mxu0 %v280
    %v308 = vpop.f32.mrf.mxu0
    %v309 = vadd.f32 %v262, %v308
    %310 = vmatmul.f32.gmra.mxu0 %v283
    %v311 = vpop.f32.mrf.mxu0
    %v312 = vadd.f32 %v267, %v311
    %313 = vmatmul.f32.gmra.mxu0 %v286
    %v314 = vpop.f32.mrf.mxu0
    %v315 = vadd.f32 %v272, %v314
    %316 = vmatmul.f32.gmra.mxu0 %v289
    %v317 = vpop.f32.mrf.mxu0
    %v318 = vadd.f32 %v277, %v317
    %319 = vdwg.mxu0
    %v320 = vmax.f32 %v309, 0.0
    %v321 = vmax.f32 %v312, 0.0
    %v322 = vmax.f32 %v315, 0.0
    %v323 = vmax.f32 %v318, 0.0
    %v324 = vld [vmem:[%s11] sm:$0xff]
    %v325 = vld [vmem:[%s11 + $0x8] sm:$0xff]
    %v326 = vld [vmem:[%s11 + $0x10] sm:$0xff]
    %v327 = vld [vmem:[%s11 + $0x18] sm:$0xff]
    %v328 = vld [vmem:[%s11 + $0x20] sm:$0xff]
    %v329 = vld [vmem:[%s11 + $0x28] sm:$0xff]
    %v330 = vld [vmem:[%s11 + $0x30] sm:$0xff]
    %v331 = vld [vmem:[%s11 + $0x38] sm:$0xff]
    %v332 = vld [vmem:[%s12] sm:$0xff]
    %v333 = vld [vmem:[%s12 + $0x8] sm:$0xff]
    %v334 = vld [vmem:[%s12 + $0x10] sm:$0xff]
    %v335 = vld [vmem:[%s12 + $0x18] sm:$0xff]
    %v336 = vld [vmem:[%s12 + $0x20] sm:$0xff]
    %v337 = vld [vmem:[%s12 + $0x28] sm:$0xff]
    %v338 = vld [vmem:[%s12 + $0x30] sm:$0xff]
    %v339 = vld [vmem:[%s12 + $0x38] sm:$0xff]
    %341 = vset.pattern.permute.xlu0 0
    %342 = vperm.xlu0 %341, %v332
    %v343 = vpop.permute.xlu0 %342
    %346 = vset.pattern.permute.xlu0 0
    %347 = vperm.xlu0 %346, %v333
    %v348 = vpop.permute.xlu0 %347
    %351 = vset.pattern.permute.xlu0 0
    %352 = vperm.xlu0 %351, %v334
    %v353 = vpop.permute.xlu0 %352
    %356 = vset.pattern.permute.xlu0 0
    %357 = vperm.xlu0 %356, %v335
    %v358 = vpop.permute.xlu0 %357
    %361 = vset.pattern.permute.xlu0 0
    %362 = vperm.xlu0 %361, %v336
    %v363 = vpop.permute.xlu0 %362
    %366 = vset.pattern.permute.xlu0 0
    %367 = vperm.xlu0 %366, %v337
    %v368 = vpop.permute.xlu0 %367
    %371 = vset.pattern.permute.xlu0 0
    %372 = vperm.xlu0 %371, %v338
    %v373 = vpop.permute.xlu0 %372
    %376 = vset.pattern.permute.xlu0 0
    %377 = vperm.xlu0 %376, %v339
    %v378 = vpop.permute.xlu0 %377
    %v381 = vsel %vm141, %v324, 0
    %v384 = vsel %vm141, %v325, 0
    %v387 = vsel %vm141, %v326, 0
    %v390 = vsel %vm141, %v327, 0
    %v393 = vsel %vm141, %v328, 0
    %v396 = vsel %vm141, %v329, 0
    %v399 = vsel %vm141, %v330, 0
    %v402 = vsel %vm141, %v331, 0
    %404 = vmatpush.msra.mxu0 0.0
    %405 = vmatpush.msra.mxu0 0.0
    %406 = vmatpush.msra.mxu0 0.0
    %407 = vmatpush.msra.mxu0 0.0
    %408 = vmatpush.msra.mxu0 0.0
    %409 = vmatpush.msra.mxu0 0.0
    %410 = vmatpush.msra.mxu0 0.0
    %411 = vmatpush.msra.mxu0 0.0
    %412 = vmatpush.msra.mxu0 0.0
    %413 = vmatpush.msra.mxu0 0.0
    %414 = vmatpush.msra.mxu0 0.0
    %415 = vmatpush.msra.mxu0 0.0
    %416 = vmatpush.msra.mxu0 %v323
    %417 = vmatpush.msra.mxu0 %v322
    %418 = vmatpush.msra.mxu0 %v321
    %419 = vmatpush.msra.mxu0 %v320
    %420 = vmatmul.f32.gmra.mxu0 %v381
    %v421 = vpop.f32.mrf.mxu0
    %v422 = vadd.f32 %v343, %v421
    %423 = vmatmul.f32.gmra.mxu0 %v384
    %v424 = vpop.f32.mrf.mxu0
    %v425 = vadd.f32 %v348, %v424
    %426 = vmatmul.f32.gmra.mxu0 %v387
    %v427 = vpop.f32.mrf.mxu0
    %v428 = vadd.f32 %v353, %v427
    %429 = vmatmul.f32.gmra.mxu0 %v390
    %v430 = vpop.f32.mrf.mxu0
    %v431 = vadd.f32 %v358, %v430
    %432 = vmatmul.f32.gmra.mxu0 %v393
    %v433 = vpop.f32.mrf.mxu0
    %v434 = vadd.f32 %v363, %v433
    %435 = vmatmul.f32.gmra.mxu0 %v396
    %v436 = vpop.f32.mrf.mxu0
    %v437 = vadd.f32 %v368, %v436
    %438 = vmatmul.f32.gmra.mxu0 %v399
    %v439 = vpop.f32.mrf.mxu0
    %v440 = vadd.f32 %v373, %v439
    %441 = vmatmul.f32.gmra.mxu0 %v402
    %v442 = vpop.f32.mrf.mxu0
    %v443 = vadd.f32 %v378, %v442
    %444 = vdwg.mxu0
    %445 = vst [vmem:[#allocation2] sm:$0xff] %v422
    %446 = vst [vmem:[#allocation2 + $0x8] sm:$0xff] %v425
    %447 = vst [vmem:[#allocation2 + $0x10] sm:$0xff] %v428
    %448 = vst [vmem:[#allocation2 + $0x18] sm:$0xff] %v431
    %449 = vst [vmem:[#allocation2 + $0x20] sm:$0xff] %v434
    %450 = vst [vmem:[#allocation2 + $0x28] sm:$0xff] %v437
    %451 = vst [vmem:[#allocation2 + $0x30] sm:$0xff] %v440
    %452 = vst [vmem:[#allocation2 + $0x38] sm:$0xff] %v443
    // Predicated region
    $region54: #{tpu_custom_call.1} parent=1 // pred_check
      _
    $region55: #{tpu_custom_call.1} parent=1 // pred_check_branch
      %454 = sbr.rel (0) target = $region57
    $region56: #{tpu_custom_call.1} parent=1 // pred_region
      %456 = vsyncadd [#allocation3], 0
      %s457 = sshll.u32 [#allocation2], 4
      %s458 = int_to_ptr.vmem [resolvable:$true] %s457
      %s459 = sshll.u32 %s13, 4
      %s460 = int_to_ptr.hbm [resolvable:$true] %s459
      %465 = dma.vmem_to_hbm [thread:$0]  %s458, 1024, %s460, [#allocation3], 128, 128, 8
    $region57: #{tpu_custom_call.1} parent=1 // pred_fallthru
      _
    // Predicated region
    $region58: #{tpu_custom_call.1} parent=1 // pred_check
      _
    $region59: #{tpu_custom_call.1} parent=1 // pred_check_branch
      %467 = sbr.rel (0) target = $region61
    $region60: #{tpu_custom_call.1} parent=1 // pred_region
      %469 = dma.done [#allocation3], 1024
    $region61: #{tpu_custom_call.1} parent=1 // pred_fallthru
      _
    %470 = vsyncpa [#allocation3], 1

</llo_original>
